<compile_context>
chip_gen: v6e
topology: v6e:2x2x1
jax: 0.10.0
libtpu: 0.0.40
codegen_flags: <defaults>
</compile_context>

<pallas_src>
import functools
import math

import jax
import jax.numpy as jnp
from jax.experimental import pallas as pl
from jax.experimental.pallas import tpu as pltpu


HIDDEN = 256          # hidden width of the torch module
LN_EPS = 1e-5         # nn.LayerNorm default eps


def _round_up(x, m):
    return ((x + m - 1) // m) * m


# ----------------------------- Pallas kernel ------------------------------- #

def _actor_kernel(num_vehicles, num_stations, out_w,
                  state_ref, w1_ref, w2_ref, wh_ref, lnp_ref, out_ref):
    V, S = num_vehicles, num_stations
    SV = S * V
    inv_n = 1.0 / float(HIDDEN)

    # packed small params: rows 0..2 = b1, gamma1, beta1 ; 3..5 = b2, gamma2,
    # beta2 ; 6 = fused head bias (first SV+V lanes) ; 7 = zero padding.
    lnp = lnp_ref[...]                                    # (8, 256) f32
    b1, g1, beta1 = lnp[0:1, :], lnp[1:2, :], lnp[2:3, :]
    b2, g2, beta2 = lnp[3:4, :], lnp[4:5, :], lnp[5:6, :]
    bh = lnp[6:7, 0:out_w]                                # (1, out_w)

    def ln_relu(h, g, b):
        # one-pass LayerNorm stats: var = E[h^2] - mean^2
        mean = jnp.sum(h, axis=-1, keepdims=True) * inv_n
        ex2 = jnp.sum(h * h, axis=-1, keepdims=True) * inv_n
        var = ex2 - mean * mean
        h = (h - mean) * jax.lax.rsqrt(var + LN_EPS) * g + b
        return jnp.maximum(h, 0.0)

    x = state_ref[...]                                    # bf16 (TB, state_dim)

    # ---- common_layer1 + LayerNorm + ReLU ----
    h = jnp.dot(x, w1_ref[...], preferred_element_type=jnp.float32) + b1
    h = ln_relu(h, g1, beta1)

    # ---- common_layer2 + LayerNorm + ReLU ----
    h = jnp.dot(h.astype(jnp.bfloat16), w2_ref[...],
                preferred_element_type=jnp.float32) + b2
    h = ln_relu(h, g2, beta2)

    # ---- fused heads: one MXU push, 128-lane output ----
    z = jnp.dot(h.astype(jnp.bfloat16), wh_ref[...],
                preferred_element_type=jnp.float32) + bh   # (TB, out_w)

    # bandwidth head: relu(linear) + 1e-6   (lanes [SV, SV+V) of z)
    bw = jnp.maximum(z[:, SV:SV + V], 0.0) + 1e-6

    # base-station head: per-vehicle softmax over S stations,
    # station-major layout (column = s*V + v).
    z_bs = z[:, 0:SV]
    m = z_bs[:, 0:V]
    for s in range(1, S):
        m = jnp.maximum(m, z_bs[:, s * V:(s + 1) * V])
    # single max-subtraction is numerically identical to torch's sub + softmax
    e = jnp.exp(z_bs - jnp.concatenate([m] * S, axis=1))   # one full-width exp
    d = e[:, 0:V]
    for s in range(1, S):
        d = d + e[:, s * V:(s + 1) * V]
    r = pl.reciprocal(d, approx=True)                      # EUP reciprocal
    probs = e * jnp.concatenate([r] * S, axis=1)

    # single lane-dense store: [probs | bandwidth | zero padding]
    pieces = [probs, bw]
    if out_w - SV - V > 0:
        pieces.append(jnp.zeros_like(z[:, SV + V:]))
    out_ref[...] = jnp.concatenate(pieces, axis=1)


# ------------------------------ JAX wrapper -------------------------------- #

def actor_forward(state, kernel_params, *, num_vehicles, num_stations):
    w1, w2, wh, lnp = kernel_params
    B, state_dim = state.shape
    V, S = num_vehicles, num_stations
    SV = S * V
    out_w = wh.shape[1]

    # batch tiling: up to 256 rows per tile (MXU-friendly), batch padded.
    if B >= 256:
        tile_b = 256
    else:
        tile_b = _round_up(B, 8)
    b_pad = _round_up(B, tile_b)
    grid = (b_pad // tile_b,)

    x = state.astype(jnp.bfloat16)
    if b_pad != B:
        x = jnp.pad(x, ((0, b_pad - B), (0, 0)))

    kernel = functools.partial(_actor_kernel, V, S, out_w)

    out = pl.pallas_call(
        kernel,
        out_shape=jax.ShapeDtypeStruct((b_pad, out_w), jnp.float32),
        grid=grid,
        in_specs=[
            pl.BlockSpec((tile_b, state_dim), lambda i: (i, 0)),
            pl.BlockSpec(w1.shape, lambda i: (0, 0)),    # weights stay resident
            pl.BlockSpec(w2.shape, lambda i: (0, 0)),
            pl.BlockSpec(wh.shape, lambda i: (0, 0)),
            pl.BlockSpec(lnp.shape, lambda i: (0, 0)),
        ],
        out_specs=pl.BlockSpec((tile_b, out_w), lambda i: (i, 0)),
        compiler_params=pltpu.CompilerParams(
            dimension_semantics=("parallel",)),
    )(x, w1, w2, wh, lnp)

    # glue: station-major flat (B, S*V) -> (B, S, V) -> (B, V, S)
    bs_flat = out[:B, :SV]
    bandwidth = out[:B, SV:SV + V]
    bs_probs = jnp.transpose(bs_flat.reshape(B, S, V), (0, 2, 1))
    return bs_probs, bandwidth


# --------------------------- parameter creation ----------------------------- #

def _xavier_uniform(key, out_features, in_features):
    # torch convention: weight is (out_features, in_features)
    bound = math.sqrt(6.0 / (in_features + out_features))
    return jax.random.uniform(key, (out_features, in_features),
                              jnp.float32, -bound, bound)


def init_actor_params(key, state_dim, num_vehicles, num_stations):
    """Parameters in the torch layout (weights are (out, in))."""
    V, S = num_vehicles, num_stations
    k1, k2, k3, k4 = jax.random.split(key, 4)
    return dict(
        w1=_xavier_uniform(k1, HIDDEN, state_dim),
        b1=jnp.zeros((HIDDEN,), jnp.float32),
        g1=jnp.ones((HIDDEN,), jnp.float32),
        beta1=jnp.zeros((HIDDEN,), jnp.float32),
        w2=_xavier_uniform(k2, HIDDEN, HIDDEN),
        b2=jnp.zeros((HIDDEN,), jnp.float32),
        g2=jnp.ones((HIDDEN,), jnp.float32),
        beta2=jnp.zeros((HIDDEN,), jnp.float32),
        w_bs=_xavier_uniform(k3, V * S, HIDDEN),   # row index = v*S + s
        b_bs=jnp.zeros((V * S,), jnp.float32),
        w_bw=_xavier_uniform(k4, V, HIDDEN),
        b_bw=jnp.zeros((V,), jnp.float32),
    )


def pack_actor_params(p, num_vehicles, num_stations):
    """Pack torch-layout params into the fused kernel layout."""
    V, S = num_vehicles, num_stations
    SV = S * V
    out_w = _round_up(SV + V, 128)
    assert SV + V <= HIDDEN, "fused head bias must fit in one 256-wide row"

    w1 = p["w1"].T.astype(jnp.bfloat16)              # (state_dim, 256)
    w2 = p["w2"].T.astype(jnp.bfloat16)              # (256, 256)

    # base-station head: reorder columns to station-major (col = s*V + v)
    wbs_sm = (p["w_bs"].T.reshape(HIDDEN, V, S)
              .transpose(0, 2, 1).reshape(HIDDEN, SV))
    bbs_sm = p["b_bs"].reshape(V, S).T.reshape(SV)

    # fused head: [bs (SV cols) | bandwidth (V cols) | zero pad to out_w]
    wh = jnp.concatenate([wbs_sm, p["w_bw"].T], axis=1)
    wh = jnp.pad(wh, ((0, 0), (0, out_w - SV - V))).astype(jnp.bfloat16)

    bh = jnp.concatenate([bbs_sm, p["b_bw"]])
    bh = jnp.pad(bh, (0, HIDDEN - (SV + V)))          # stored as a 256-wide row

    lnp = jnp.stack([p["b1"], p["g1"], p["beta1"],
                     p["b2"], p["g2"], p["beta2"],
                     bh, jnp.zeros((HIDDEN,), jnp.float32)],
                    axis=0).astype(jnp.float32)       # (8, 256)

    return (w1, w2, wh, lnp)


# --------------------------- pure-JAX reference ----------------------------- #

def actor_reference(state, p, *, num_vehicles, num_stations):
    """f32 reference matching the PyTorch forward exactly."""
    V, S = num_vehicles, num_stations
    B = state.shape[0]

    def ln(h, g, b):
        mu = jnp.mean(h, axis=-1, keepdims=True)
        var = jnp.mean((h - mu) ** 2, axis=-1, keepdims=True)
        return (h - mu) * jax.lax.rsqrt(var + LN_EPS) * g + b

    h = jnp.maximum(ln(state @ p["w1"].T + p["b1"], p["g1"], p["beta1"]), 0.0)
    h = jnp.maximum(ln(h @ p["w2"].T + p["b2"], p["g2"], p["beta2"]), 0.0)

    logits = (h @ p["w_bs"].T + p["b_bs"]).reshape(B, V, S)
    logits = logits - jnp.max(logits, axis=-1, keepdims=True)
    probs = jax.nn.softmax(logits, axis=-1)

    bw = jnp.maximum(h @ p["w_bw"].T + p["b_bw"], 0.0) + 1e-6
    return probs, bw


# ----------------------------------- main ----------------------------------- #

if __name__ == "__main__":
    # Small synthetic V2X-like dimensions (the env is not available here).
    batch = 2
    state_dim = 32
    num_vehicles = 8
    num_stations = 4
    total_bandwidth = 100.0  # stored on the torch module; unused in forward

    key = jax.random.PRNGKey(0)
    pkey, skey = jax.random.split(key)

    params = init_actor_params(pkey, state_dim, num_vehicles, num_stations)
    kparams = pack_actor_params(params, num_vehicles, num_stations)
    state = jax.random.normal(skey, (batch, state_dim), jnp.float32)

    fwd = jax.jit(functools.partial(actor_forward,
                                    num_vehicles=num_vehicles,
                                    num_stations=num_stations))
    bs_probs, bandwidth = fwd(state, kparams)
    bs_probs = jax.block_until_ready(bs_probs)
    bandwidth = jax.block_until_ready(bandwidth)

    # sanity-check against the f32 reference (kernel uses bf16 MXU operands
    # and an approximate reciprocal in the softmax, hence loose tolerances)
    ref_probs, ref_bw = actor_reference(
        state, params, num_vehicles=num_vehicles, num_stations=num_stations)
    assert bs_probs.shape == (batch, num_vehicles, num_stations)
    assert bandwidth.shape == (batch, num_vehicles)
    assert jnp.allclose(bs_probs, ref_probs, atol=3e-2, rtol=3e-2), \
        float(jnp.max(jnp.abs(bs_probs - ref_probs)))
    assert jnp.allclose(bandwidth, ref_bw, atol=3e-2, rtol=3e-2), \
        float(jnp.max(jnp.abs(bandwidth - ref_bw)))
    assert jnp.allclose(jnp.sum(bs_probs, axis=-1), 1.0, atol=1e-2)

    print("KERNEL_OK")
</pallas_src>

<mosaic_0001>
module attributes {stable_mosaic.version = 11 : i64} {
  func.func @_actor_kernel(%arg0: i32, %arg1: memref<8x32xbf16, #tpu.memory_space<vmem>>, %arg2: memref<32x256xbf16, #tpu.memory_space<vmem>>, %arg3: memref<256x256xbf16, #tpu.memory_space<vmem>>, %arg4: memref<256x128xbf16, #tpu.memory_space<vmem>>, %arg5: memref<8x256xf32, #tpu.memory_space<vmem>>, %arg6: memref<8x128xf32, #tpu.memory_space<vmem>>) attributes {dimension_semantics = [#tpu.dimension_semantics<parallel>], iteration_bounds = array<i64: 1>, scalar_prefetch = 0 : i64, scratch_operands = 0 : i64, tpu.core_type = #tpu.core_type<tc>, window_params = [{transform_indices = @transform_0, window_bounds = array<i64: 8, 32>}, {pipeline_mode = #tpu.pipeline_mode<synchronous>, transform_indices = @transform_1, window_bounds = array<i64: 32, 256>}, {pipeline_mode = #tpu.pipeline_mode<synchronous>, transform_indices = @transform_2, window_bounds = array<i64: 256, 256>}, {pipeline_mode = #tpu.pipeline_mode<synchronous>, transform_indices = @transform_3, window_bounds = array<i64: 256, 128>}, {pipeline_mode = #tpu.pipeline_mode<synchronous>, transform_indices = @transform_4, window_bounds = array<i64: 8, 256>}, {transform_indices = @transform_5, window_bounds = array<i64: 8, 128>}]} {
    %c0 = arith.constant 0 : index
    %c0_0 = arith.constant 0 : index
    %0 = vector.load %arg5[%c0, %c0_0] : memref<8x256xf32, #tpu.memory_space<vmem>>, vector<8x256xf32>
    %1 = vector.extract_strided_slice %0 {offsets = [0, 0], sizes = [1, 256], strides = [1, 1]} : vector<8x256xf32> to vector<1x256xf32>
    %2 = vector.extract_strided_slice %0 {offsets = [1, 0], sizes = [1, 256], strides = [1, 1]} : vector<8x256xf32> to vector<1x256xf32>
    %3 = vector.extract_strided_slice %0 {offsets = [2, 0], sizes = [1, 256], strides = [1, 1]} : vector<8x256xf32> to vector<1x256xf32>
    %4 = vector.extract_strided_slice %0 {offsets = [3, 0], sizes = [1, 256], strides = [1, 1]} : vector<8x256xf32> to vector<1x256xf32>
    %5 = vector.extract_strided_slice %0 {offsets = [4, 0], sizes = [1, 256], strides = [1, 1]} : vector<8x256xf32> to vector<1x256xf32>
    %6 = vector.extract_strided_slice %0 {offsets = [5, 0], sizes = [1, 256], strides = [1, 1]} : vector<8x256xf32> to vector<1x256xf32>
    %7 = vector.extract_strided_slice %0 {offsets = [6, 0], sizes = [1, 128], strides = [1, 1]} : vector<8x256xf32> to vector<1x128xf32>
    %c0_1 = arith.constant 0 : index
    %c0_2 = arith.constant 0 : index
    %8 = vector.load %arg1[%c0_1, %c0_2] : memref<8x32xbf16, #tpu.memory_space<vmem>>, vector<8x32xbf16>
    %c0_3 = arith.constant 0 : index
    %c0_4 = arith.constant 0 : index
    %9 = vector.load %arg2[%c0_3, %c0_4] : memref<32x256xbf16, #tpu.memory_space<vmem>>, vector<32x256xbf16>
    %cst = arith.constant dense<0.000000e+00> : vector<8x256xf32>
    %10 = tpu.matmul %8, %9, %cst {dimension_numbers = #tpu.dot_dimension_numbers<[1], [0], [0], [1], [0, 0, 1, 1], [], []>} : vector<8x32xbf16>, vector<32x256xbf16>, vector<8x256xf32> -> vector<8x256xf32>
    %11 = vector.broadcast %1 : vector<1x256xf32> to vector<8x256xf32>
    %12 = arith.addf %10, %11 : vector<8x256xf32>
    %cst_5 = arith.constant dense<0.000000e+00> : vector<8xf32>
    %13 = vector.multi_reduction <add>, %12, %cst_5 [1] : vector<8x256xf32> to vector<8xf32>
    %14 = vector.shape_cast %13 : vector<8xf32> to vector<8x1xf32>
    %cst_6 = arith.constant 3.906250e-03 : f32
    %15 = vector.broadcast %cst_6 : f32 to vector<8x1xf32>
    %16 = arith.mulf %14, %15 : vector<8x1xf32>
    %17 = arith.mulf %12, %12 : vector<8x256xf32>
    %cst_7 = arith.constant dense<0.000000e+00> : vector<8xf32>
    %18 = vector.multi_reduction <add>, %17, %cst_7 [1] : vector<8x256xf32> to vector<8xf32>
    %19 = vector.shape_cast %18 : vector<8xf32> to vector<8x1xf32>
    %cst_8 = arith.constant 3.906250e-03 : f32
    %20 = vector.broadcast %cst_8 : f32 to vector<8x1xf32>
    %21 = arith.mulf %19, %20 : vector<8x1xf32>
    %22 = arith.mulf %16, %16 : vector<8x1xf32>
    %23 = arith.subf %21, %22 : vector<8x1xf32>
    %24 = vector.broadcast %16 : vector<8x1xf32> to vector<8x256xf32>
    %25 = arith.subf %12, %24 : vector<8x256xf32>
    %cst_9 = arith.constant 9.99999974E-6 : f32
    %26 = vector.broadcast %cst_9 : f32 to vector<8x1xf32>
    %27 = arith.addf %23, %26 : vector<8x1xf32>
    %28 = math.rsqrt %27 : vector<8x1xf32>
    %29 = vector.broadcast %28 : vector<8x1xf32> to vector<8x256xf32>
    %30 = arith.mulf %25, %29 : vector<8x256xf32>
    %31 = vector.broadcast %2 : vector<1x256xf32> to vector<8x256xf32>
    %32 = arith.mulf %30, %31 : vector<8x256xf32>
    %33 = vector.broadcast %3 : vector<1x256xf32> to vector<8x256xf32>
    %34 = arith.addf %32, %33 : vector<8x256xf32>
    %cst_10 = arith.constant 0.000000e+00 : f32
    %35 = vector.broadcast %cst_10 : f32 to vector<8x256xf32>
    %36 = arith.maximumf %34, %35 : vector<8x256xf32>
    %37 = arith.truncf %36 : vector<8x256xf32> to vector<8x256xbf16>
    %c0_11 = arith.constant 0 : index
    %c0_12 = arith.constant 0 : index
    %38 = vector.load %arg3[%c0_11, %c0_12] : memref<256x256xbf16, #tpu.memory_space<vmem>>, vector<256x256xbf16>
    %cst_13 = arith.constant dense<0.000000e+00> : vector<8x256xf32>
    %39 = tpu.matmul %37, %38, %cst_13 {dimension_numbers = #tpu.dot_dimension_numbers<[1], [0], [0], [1], [0, 0, 1, 1], [], []>} : vector<8x256xbf16>, vector<256x256xbf16>, vector<8x256xf32> -> vector<8x256xf32>
    %40 = vector.broadcast %4 : vector<1x256xf32> to vector<8x256xf32>
    %41 = arith.addf %39, %40 : vector<8x256xf32>
    %cst_14 = arith.constant dense<0.000000e+00> : vector<8xf32>
    %42 = vector.multi_reduction <add>, %41, %cst_14 [1] : vector<8x256xf32> to vector<8xf32>
    %43 = vector.shape_cast %42 : vector<8xf32> to vector<8x1xf32>
    %cst_15 = arith.constant 3.906250e-03 : f32
    %44 = vector.broadcast %cst_15 : f32 to vector<8x1xf32>
    %45 = arith.mulf %43, %44 : vector<8x1xf32>
    %46 = arith.mulf %41, %41 : vector<8x256xf32>
    %cst_16 = arith.constant dense<0.000000e+00> : vector<8xf32>
    %47 = vector.multi_reduction <add>, %46, %cst_16 [1] : vector<8x256xf32> to vector<8xf32>
    %48 = vector.shape_cast %47 : vector<8xf32> to vector<8x1xf32>
    %cst_17 = arith.constant 3.906250e-03 : f32
    %49 = vector.broadcast %cst_17 : f32 to vector<8x1xf32>
    %50 = arith.mulf %48, %49 : vector<8x1xf32>
    %51 = arith.mulf %45, %45 : vector<8x1xf32>
    %52 = arith.subf %50, %51 : vector<8x1xf32>
    %53 = vector.broadcast %45 : vector<8x1xf32> to vector<8x256xf32>
    %54 = arith.subf %41, %53 : vector<8x256xf32>
    %cst_18 = arith.constant 9.99999974E-6 : f32
    %55 = vector.broadcast %cst_18 : f32 to vector<8x1xf32>
    %56 = arith.addf %52, %55 : vector<8x1xf32>
    %57 = math.rsqrt %56 : vector<8x1xf32>
    %58 = vector.broadcast %57 : vector<8x1xf32> to vector<8x256xf32>
    %59 = arith.mulf %54, %58 : vector<8x256xf32>
    %60 = vector.broadcast %5 : vector<1x256xf32> to vector<8x256xf32>
    %61 = arith.mulf %59, %60 : vector<8x256xf32>
    %62 = vector.broadcast %6 : vector<1x256xf32> to vector<8x256xf32>
    %63 = arith.addf %61, %62 : vector<8x256xf32>
    %cst_19 = arith.constant 0.000000e+00 : f32
    %64 = vector.broadcast %cst_19 : f32 to vector<8x256xf32>
    %65 = arith.maximumf %63, %64 : vector<8x256xf32>
    %66 = arith.truncf %65 : vector<8x256xf32> to vector<8x256xbf16>
    %c0_20 = arith.constant 0 : index
    %c0_21 = arith.constant 0 : index
    %67 = vector.load %arg4[%c0_20, %c0_21] : memref<256x128xbf16, #tpu.memory_space<vmem>>, vector<256x128xbf16>
    %cst_22 = arith.constant dense<0.000000e+00> : vector<8x128xf32>
    %68 = tpu.matmul %66, %67, %cst_22 {dimension_numbers = #tpu.dot_dimension_numbers<[1], [0], [0], [1], [0, 0, 1, 1], [], []>} : vector<8x256xbf16>, vector<256x128xbf16>, vector<8x128xf32> -> vector<8x128xf32>
    %69 = vector.broadcast %7 : vector<1x128xf32> to vector<8x128xf32>
    %70 = arith.addf %68, %69 : vector<8x128xf32>
    %71 = vector.extract_strided_slice %70 {offsets = [0, 32], sizes = [8, 8], strides = [1, 1]} : vector<8x128xf32> to vector<8x8xf32>
    %cst_23 = arith.constant 0.000000e+00 : f32
    %72 = vector.broadcast %cst_23 : f32 to vector<8x8xf32>
    %73 = arith.maximumf %71, %72 : vector<8x8xf32>
    %cst_24 = arith.constant 9.99999997E-7 : f32
    %74 = vector.broadcast %cst_24 : f32 to vector<8x8xf32>
    %75 = arith.addf %73, %74 : vector<8x8xf32>
    %76 = vector.extract_strided_slice %70 {offsets = [0, 0], sizes = [8, 32], strides = [1, 1]} : vector<8x128xf32> to vector<8x32xf32>
    %77 = vector.extract_strided_slice %76 {offsets = [0, 0], sizes = [8, 8], strides = [1, 1]} : vector<8x32xf32> to vector<8x8xf32>
    %78 = vector.extract_strided_slice %76 {offsets = [0, 8], sizes = [8, 8], strides = [1, 1]} : vector<8x32xf32> to vector<8x8xf32>
    %79 = arith.maximumf %77, %78 : vector<8x8xf32>
    %80 = vector.extract_strided_slice %76 {offsets = [0, 16], sizes = [8, 8], strides = [1, 1]} : vector<8x32xf32> to vector<8x8xf32>
    %81 = arith.maximumf %79, %80 : vector<8x8xf32>
    %82 = vector.extract_strided_slice %76 {offsets = [0, 24], sizes = [8, 8], strides = [1, 1]} : vector<8x32xf32> to vector<8x8xf32>
    %83 = arith.maximumf %81, %82 : vector<8x8xf32>
    %84 = tpu.concatenate %83, %83, %83, %83 in 1 : vector<8x8xf32>, vector<8x8xf32>, vector<8x8xf32>, vector<8x8xf32> -> vector<8x32xf32>
    %85 = arith.subf %76, %84 : vector<8x32xf32>
    %86 = math.exp %85 : vector<8x32xf32>
    %87 = vector.extract_strided_slice %86 {offsets = [0, 0], sizes = [8, 8], strides = [1, 1]} : vector<8x32xf32> to vector<8x8xf32>
    %88 = vector.extract_strided_slice %86 {offsets = [0, 8], sizes = [8, 8], strides = [1, 1]} : vector<8x32xf32> to vector<8x8xf32>
    %89 = arith.addf %87, %88 : vector<8x8xf32>
    %90 = vector.extract_strided_slice %86 {offsets = [0, 16], sizes = [8, 8], strides = [1, 1]} : vector<8x32xf32> to vector<8x8xf32>
    %91 = arith.addf %89, %90 : vector<8x8xf32>
    %92 = vector.extract_strided_slice %86 {offsets = [0, 24], sizes = [8, 8], strides = [1, 1]} : vector<8x32xf32> to vector<8x8xf32>
    %93 = arith.addf %91, %92 : vector<8x8xf32>
    %94 = tpu.reciprocal %93 {approx = true} : vector<8x8xf32> -> vector<8x8xf32>
    %95 = tpu.concatenate %94, %94, %94, %94 in 1 : vector<8x8xf32>, vector<8x8xf32>, vector<8x8xf32>, vector<8x8xf32> -> vector<8x32xf32>
    %96 = arith.mulf %86, %95 : vector<8x32xf32>
    %cst_25 = arith.constant 0.000000e+00 : f32
    %97 = vector.broadcast %cst_25 : f32 to vector<8x88xf32>
    %98 = tpu.concatenate %96, %75, %97 in 1 : vector<8x32xf32>, vector<8x8xf32>, vector<8x88xf32> -> vector<8x128xf32>
    %c0_26 = arith.constant 0 : index
    %c0_27 = arith.constant 0 : index
    %99 = vector.load %arg6[%c0_26, %c0_27] : memref<8x128xf32, #tpu.memory_space<vmem>>, vector<8x128xf32>
    tpu.vector_store %arg6[%c0_26, %c0_27], %98 {strides = array<i32>} : memref<8x128xf32, #tpu.memory_space<vmem>>, vector<8x128xf32>,
    return
  }
  func.func @transform_0(%arg0: i32) -> (i32, i32) {
    %c0_i32 = arith.constant 0 : i32
    %c0_i32_0 = arith.constant 0 : i32
    return %arg0, %c0_i32 : i32, i32
  }
  func.func @transform_1(%arg0: i32) -> (i32, i32) {
    %c0_i32 = arith.constant 0 : i32
    %c0_i32_0 = arith.constant 0 : i32
    %c0_i32_1 = arith.constant 0 : i32
    return %c0_i32, %c0_i32_0 : i32, i32
  }
  func.func @transform_2(%arg0: i32) -> (i32, i32) {
    %c0_i32 = arith.constant 0 : i32
    %c0_i32_0 = arith.constant 0 : i32
    %c0_i32_1 = arith.constant 0 : i32
    return %c0_i32, %c0_i32_0 : i32, i32
  }
  func.func @transform_3(%arg0: i32) -> (i32, i32) {
    %c0_i32 = arith.constant 0 : i32
    %c0_i32_0 = arith.constant 0 : i32
    %c0_i32_1 = arith.constant 0 : i32
    return %c0_i32, %c0_i32_0 : i32, i32
  }
  func.func @transform_4(%arg0: i32) -> (i32, i32) {
    %c0_i32 = arith.constant 0 : i32
    %c0_i32_0 = arith.constant 0 : i32
    %c0_i32_1 = arith.constant 0 : i32
    return %c0_i32, %c0_i32_0 : i32, i32
  }
  func.func @transform_5(%arg0: i32) -> (i32, i32) {
    %c0_i32 = arith.constant 0 : i32
    %c0_i32_0 = arith.constant 0 : i32
    return %arg0, %c0_i32 : i32, i32
  }
}

</mosaic_0001>

<llo_original>
// kernel: actor_forward.1
$region0: #{actor_forward.1}
  #allocation0 [shape = 'u32[]', space=smem, size = 0x4, offset = 0x4, fixed_abs, tag = 'smem constant byte address 0x4 - core index']
  #allocation1 [shape = 'u32[144,128]{1,0:T(1,128)}', space=vmem, size = 0x12000, scoped, tag = 'internal scratch']
  %s0 = inlined_call_operand.vmem [shape: bf16[8,32], index: 0, kind: input, shape index: {}]
  %s1 = inlined_call_operand.hbm [shape: bf16[32,256], index: 1, kind: input, shape index: {}]
  %s2 = inlined_call_operand.hbm [shape: bf16[256,256], index: 2, kind: input, shape index: {}]
  %s3 = inlined_call_operand.hbm [shape: bf16[256,128], index: 3, kind: input, shape index: {}]
  %s4 = inlined_call_operand.vmem [shape: f32[8,256], index: 4, kind: input, shape index: {}]
  %s5 = inlined_call_operand.vmem [shape: f32[8,128], index: 5, kind: output, shape index: {}]
  %s6 = sld [smem:[#allocation0]]
  $region42: #{actor_forward.1} parent=0
    _
  %s8 = ssub.s32 1, %s6
  %s9 = scalar_select 0, %s8, %s6
  $region1: #{actor_forward.1} parent=0
    #allocation2 [shape = 'u8[16384]{0}', space=vmem, size = 0x4000, scoped, tag = 'input window, operand 1, single buffered']
    #allocation3 [shape = 's32[1]{0}', space=sflag, size = 0x4, scoped, tag = 'scoped memory for actor_forward.1']
    #allocation4 [shape = 'u8[131072]{0}', space=vmem, size = 0x20000, scoped, tag = 'input window, operand 2, single buffered']
    #allocation5 [shape = 's32[1]{0}', space=sflag, size = 0x4, scoped, tag = 'scoped memory for actor_forward.1']
    #allocation6 [shape = 'u8[65536]{0}', space=vmem, size = 0x10000, scoped, tag = 'input window, operand 3, single buffered']
    %10 = vsyncpa [#allocation3], 0
    %11 = vsyncpa [#allocation5], 0
    // Predicated region
    $region2: #{actor_forward.1} parent=1 // pred_check
      _
    $region3: #{actor_forward.1} parent=1 // pred_check_branch
      %13 = sbr.rel (0) target = $region5
    $region4: #{actor_forward.1} parent=1 // pred_region
      _
    $region5: #{actor_forward.1} parent=1 // pred_fallthru
      _
    // Predicated region
    $region6: #{actor_forward.1} parent=1 // pred_check
      _
    $region7: #{actor_forward.1} parent=1 // pred_check_branch
      %15 = sbr.rel (0) target = $region9
    $region8: #{actor_forward.1} parent=1 // pred_region
      %s17 = ssub.s32 512, 512
      %18 = vsyncadd [#allocation3], %s17
      %s19 = sshll.u32 [#allocation2], 4
      %s20 = int_to_ptr.vmem [resolvable:$true] %s19
      %25 = dma.hbm_to_vmem [thread:$0]  %s1, 512, %s20, [#allocation3], 128, 128, 8
    $region9: #{actor_forward.1} parent=1 // pred_fallthru
      _
    // Predicated region
    $region10: #{actor_forward.1} parent=1 // pred_check
      _
    $region11: #{actor_forward.1} parent=1 // pred_check_branch
      %27 = sbr.rel (0) target = $region13
    $region12: #{actor_forward.1} parent=1 // pred_region
      %s29 = ssub.s32 4096, 4096
      %30 = vsyncadd [#allocation5], %s29
      %s31 = sshll.u32 [#allocation4], 4
      %s32 = int_to_ptr.vmem [resolvable:$true] %s31
      %37 = dma.hbm_to_vmem [thread:$0]  %s2, 4096, %s32, [#allocation5], 128, 128, 8
    $region13: #{actor_forward.1} parent=1 // pred_fallthru
      _
    // Predicated region
    $region14: #{actor_forward.1} parent=1 // pred_check
      _
    $region15: #{actor_forward.1} parent=1 // pred_check_branch
      %39 = sbr.rel (0) target = $region17
    $region16: #{actor_forward.1} parent=1 // pred_region
      %s41 = ssub.s32 2048, 2048
      %42 = vsyncadd [#allocation5], %s41
      %s43 = sshll.u32 [#allocation6], 4
      %s44 = int_to_ptr.vmem [resolvable:$true] %s43
      %49 = dma.hbm_to_vmem [thread:$0]  %s3, 2048, %s44, [#allocation5], 64, 64, 4
    $region17: #{actor_forward.1} parent=1 // pred_fallthru
      _
    // Predicated region
    $region18: #{actor_forward.1} parent=1 // pred_check
      _
    $region19: #{actor_forward.1} parent=1 // pred_check_branch
      %51 = sbr.rel (0) target = $region21
    $region20: #{actor_forward.1} parent=1 // pred_region
      _
    $region21: #{actor_forward.1} parent=1 // pred_fallthru
      _
    // Predicated region
    $region22: #{actor_forward.1} parent=1 // pred_check
      _
    $region23: #{actor_forward.1} parent=1 // pred_check_branch
      %53 = sbr.rel (0) target = $region25
    $region24: #{actor_forward.1} parent=1 // pred_region
      %54 = dma.done [#allocation3], 512
    $region25: #{actor_forward.1} parent=1 // pred_fallthru
      _
    // Predicated region
    $region26: #{actor_forward.1} parent=1 // pred_check
      _
    $region27: #{actor_forward.1} parent=1 // pred_check_branch
      %56 = sbr.rel (0) target = $region29
    $region28: #{actor_forward.1} parent=1 // pred_region
      %57 = dma.done [#allocation5], 4096
    $region29: #{actor_forward.1} parent=1 // pred_fallthru
      _
    // Predicated region
    $region30: #{actor_forward.1} parent=1 // pred_check
      _
    $region31: #{actor_forward.1} parent=1 // pred_check_branch
      %59 = sbr.rel (0) target = $region33
    $region32: #{actor_forward.1} parent=1 // pred_region
      %60 = dma.done [#allocation5], 2048
    $region33: #{actor_forward.1} parent=1 // pred_fallthru
      _
    %v62 = vld [vmem:[%s4] sm:$0xff]
    %v63 = vld [vmem:[%s4 + $0x8] sm:$0xff]
    %v64 = vld [vmem:[%s0] sm:$0xf]
    %v65 = vld [vmem:[#allocation2] sm:$0xff]
    %v66 = vld [vmem:[#allocation2 + $0x8] sm:$0xff]
    %v67 = vld [vmem:[#allocation2 + $0x10] sm:$0xff]
    %v68 = vld [vmem:[#allocation2 + $0x18] sm:$0xff]
    %v69 = vlaneseq
    %v70 = vshrl.u32 %v69, 7
    %v71 = vsub.s32 0, %v70
    %v72 = vrot.slane %v62, %v71
    %v73 = vlaneseq
    %v74 = vshrl.u32 %v73, 7
    %v75 = vsub.s32 0, %v74
    %v76 = vrot.slane %v63, %v75
    %v81 = vunpack.c.l.b16 %v65
    %v82 = vunpack.c.h.b16 %v65
    %v83 = vunpack.c.l.b16 %v66
    %v84 = vunpack.c.h.b16 %v66
    %v85 = vunpack.c.l.b16 %v67
    %v86 = vunpack.c.h.b16 %v67
    %v87 = vunpack.c.l.b16 %v68
    %v88 = vunpack.c.h.b16 %v68
    %v89 = vpack.c.b16 %v83, %v81
    %v90 = vpack.c.b16 %v84, %v82
    %v91 = vpack.c.b16 %v87, %v85
    %v92 = vpack.c.b16 %v88, %v86
    %vm97 = vcmask 261120
    %v99 = vsel %vm97, %v64, 0
    %101 = vmatprep.subr.bf16.mxu0 0
    %102 = vmatpush1.bf16.msra.mxu0 0
    %103 = vmatprep.subr.bf16.mxu0 0
    %104 = vmatpush1.bf16.msra.mxu0 0
    %105 = vmatprep.subr.bf16.mxu0 0
    %106 = vmatpush1.bf16.msra.mxu0 0
    %107 = vmatprep.subr.bf16.mxu0 0
    %108 = vmatpush1.bf16.msra.mxu0 0
    %109 = vmatprep.subr.bf16.mxu0 0
    %110 = vmatpush1.bf16.msra.mxu0 0
    %111 = vmatprep.subr.bf16.mxu0 0
    %112 = vmatpush1.bf16.msra.mxu0 0
    %113 = vmatprep.subr.bf16.mxu0 %v92
    %114 = vmatpush1.bf16.msra.mxu0 %v91
    %115 = vmatprep.subr.bf16.mxu0 %v90
    %116 = vmatpush1.bf16.msra.mxu0 %v89
    %117 = vmatprep.subr.bf16.mxu0 0
    %118 = vmatpush2.bf16.msra.mxu0 0
    %119 = vmatprep.subr.bf16.mxu0 0
    %120 = vmatpush2.bf16.msra.mxu0 0
    %121 = vmatprep.subr.bf16.mxu0 0
    %122 = vmatpush2.bf16.msra.mxu0 0
    %123 = vmatprep.subr.bf16.mxu0 0
    %124 = vmatpush2.bf16.msra.mxu0 0
    %125 = vmatprep.subr.bf16.mxu0 0
    %126 = vmatpush2.bf16.msra.mxu0 0
    %127 = vmatprep.subr.bf16.mxu0 0
    %128 = vmatpush2.bf16.msra.mxu0 0
    %129 = vmatprep.subr.bf16.mxu0 0
    %130 = vmatpush2.bf16.msra.mxu0 0
    %131 = vmatprep.subr.bf16.mxu0 0
    %132 = vmatpush2.bf16.msra.mxu0 0
    %133 = vmatprep.mubr.bf16.mxu0 0
    %134 = vmatmul.mubr.bf16.gmra.mxu0 %v99
    %v135 = vpop.f32.mrf.mxu0
    %v136 = vadd.f32 %v72, %v135
    %v137 = vpop.f32.mrf.mxu0
    %v138 = vadd.f32 %v76, %v137
    %v139 = vpop.f32.mrf.mxu0
    %v140 = vpop.f32.mrf.mxu0
    %141 = vdwg.mxu0
    %v142 = vadd.f32 %v136, %v138
    %143 = vadd.xlane.f32.xlu0 %v142
    %v144 = vpop.xlane.xlu0 %143
    %v145 = vmul.f32 %v144, 0.00390625
    %v146 = vmul.f32 %v136, %v136
    %v147 = vmul.f32 %v138, %v138
    %v148 = vadd.f32 %v146, %v147
    %149 = vadd.xlane.f32.xlu0 %v148
    %v150 = vpop.xlane.xlu0 %149
    %v151 = vmul.f32 %v150, 0.00390625
    %v152 = vmul.f32 %v145, %v145
    %v153 = vsub.f32 %v151, %v152
    %v154 = vsub.f32 %v136, %v145
    %v155 = vsub.f32 %v138, %v145
    %v156 = vadd.f32 %v153, 1e-05
    %v157 = vrsqrt.pop %v156
    %v158 = vmul.f32 %v154, %v157
    %v159 = vmul.f32 %v155, %v157
    %v160 = vlaneseq
    %v161 = vshrl.u32 %v160, 7
    %v162 = vsub.s32 1, %v161
    %v163 = vrot.slane %v62, %v162
    %v164 = vlaneseq
    %v165 = vshrl.u32 %v164, 7
    %v166 = vsub.s32 1, %v165
    %v167 = vrot.slane %v63, %v166
    %v168 = vmul.f32 %v158, %v163
    %v169 = vmul.f32 %v159, %v167
    %v170 = vlaneseq
    %v171 = vshrl.u32 %v170, 7
    %v172 = vsub.s32 2, %v171
    %v173 = vrot.slane %v62, %v172
    %v174 = vlaneseq
    %v175 = vshrl.u32 %v174, 7
    %v176 = vsub.s32 2, %v175
    %v177 = vrot.slane %v63, %v176
    %v178 = vadd.f32 %v168, %v173
    %v179 = vadd.f32 %v169, %v177
    %v180 = vmax.f32 %v178, 0.0
    %v181 = vmax.f32 %v179, 0.0
    %v182 = vpack.c.bf16 %v180, %v180
    %v183 = vpack.c.bf16 %v181, %v181
    %v184 = vld [vmem:[#allocation4] sm:$0xff]
    %v185 = vld [vmem:[#allocation4 + $0x8] sm:$0xff]
    %v186 = vld [vmem:[#allocation4 + $0x10] sm:$0xff]
    %v187 = vld [vmem:[#allocation4 + $0x18] sm:$0xff]
    %v188 = vld [vmem:[#allocation4 + $0x20] sm:$0xff]
    %v189 = vld [vmem:[#allocation4 + $0x28] sm:$0xff]
    %v190 = vld [vmem:[#allocation4 + $0x30] sm:$0xff]
    %v191 = vld [vmem:[#allocation4 + $0x38] sm:$0xff]
    %v192 = vld [vmem:[#allocation4 + $0x40] sm:$0xff]
    %v193 = vld [vmem:[#allocation4 + $0x48] sm:$0xff]
    %v194 = vld [vmem:[#allocation4 + $0x50] sm:$0xff]
    %v195 = vld [vmem:[#allocation4 + $0x58] sm:$0xff]
    %v196 = vld [vmem:[#allocation4 + $0x60] sm:$0xff]
    %v197 = vld [vmem:[#allocation4 + $0x68] sm:$0xff]
    %v198 = vld [vmem:[#allocation4 + $0x70] sm:$0xff]
    %v199 = vld [vmem:[#allocation4 + $0x78] sm:$0xff]
    %v200 = vld [vmem:[#allocation4 + $0x80] sm:$0xff]
    %v201 = vld [vmem:[#allocation4 + $0x88] sm:$0xff]
    %v202 = vld [vmem:[#allocation4 + $0x90] sm:$0xff]
    %v203 = vld [vmem:[#allocation4 + $0x98] sm:$0xff]
    %v204 = vld [vmem:[#allocation4 + $0xa0] sm:$0xff]
    %v205 = vld [vmem:[#allocation4 + $0xa8] sm:$0xff]
    %v206 = vld [vmem:[#allocation4 + $0xb0] sm:$0xff]
    %v207 = vld [vmem:[#allocation4 + $0xb8] sm:$0xff]
    %v208 = vld [vmem:[#allocation4 + $0xc0] sm:$0xff]
    %v209 = vld [vmem:[#allocation4 + $0xc8] sm:$0xff]
    %v210 = vld [vmem:[#allocation4 + $0xd0] sm:$0xff]
    %v211 = vld [vmem:[#allocation4 + $0xd8] sm:$0xff]
    %v212 = vld [vmem:[#allocation4 + $0xe0] sm:$0xff]
    %v213 = vld [vmem:[#allocation4 + $0xe8] sm:$0xff]
    %v214 = vld [vmem:[#allocation4 + $0xf0] sm:$0xff]
    %v215 = vld [vmem:[#allocation4 + $0xf8] sm:$0xff]
    %v216 = vlaneseq
    %v217 = vshrl.u32 %v216, 7
    %v218 = vsub.s32 3, %v217
    %v219 = vrot.slane %v62, %v218
    %v220 = vlaneseq
    %v221 = vshrl.u32 %v220, 7
    %v222 = vsub.s32 3, %v221
    %v223 = vrot.slane %v63, %v222
    %v256 = vunpack.c.l.b16 %v184
    %v257 = vunpack.c.h.b16 %v184
    %v258 = vunpack.c.l.b16 %v185
    %v259 = vunpack.c.h.b16 %v185
    %v260 = vunpack.c.l.b16 %v186
    %v261 = vunpack.c.h.b16 %v186
    %v262 = vunpack.c.l.b16 %v187
    %v263 = vunpack.c.h.b16 %v187
    %v264 = vunpack.c.l.b16 %v188
    %v265 = vunpack.c.h.b16 %v188
    %v266 = vunpack.c.l.b16 %v189
    %v267 = vunpack.c.h.b16 %v189
    %v268 = vunpack.c.l.b16 %v190
    %v269 = vunpack.c.h.b16 %v190
    %v270 = vunpack.c.l.b16 %v191
    %v271 = vunpack.c.h.b16 %v191
    %v272 = vunpack.c.l.b16 %v192
    %v273 = vunpack.c.h.b16 %v192
    %v274 = vunpack.c.l.b16 %v193
    %v275 = vunpack.c.h.b16 %v193
    %v276 = vunpack.c.l.b16 %v194
    %v277 = vunpack.c.h.b16 %v194
    %v278 = vunpack.c.l.b16 %v195
    %v279 = vunpack.c.h.b16 %v195
    %v280 = vunpack.c.l.b16 %v196
    %v281 = vunpack.c.h.b16 %v196
    %v282 = vunpack.c.l.b16 %v197
    %v283 = vunpack.c.h.b16 %v197
    %v284 = vunpack.c.l.b16 %v198
    %v285 = vunpack.c.h.b16 %v198
    %v286 = vunpack.c.l.b16 %v199
    %v287 = vunpack.c.h.b16 %v199
    %v288 = vunpack.c.l.b16 %v200
    %v289 = vunpack.c.h.b16 %v200
    %v290 = vunpack.c.l.b16 %v201
    %v291 = vunpack.c.h.b16 %v201
    %v292 = vunpack.c.l.b16 %v202
    %v293 = vunpack.c.h.b16 %v202
    %v294 = vunpack.c.l.b16 %v203
    %v295 = vunpack.c.h.b16 %v203
    %v296 = vunpack.c.l.b16 %v204
    %v297 = vunpack.c.h.b16 %v204
    %v298 = vunpack.c.l.b16 %v205
    %v299 = vunpack.c.h.b16 %v205
    %v300 = vunpack.c.l.b16 %v206
    %v301 = vunpack.c.h.b16 %v206
    %v302 = vunpack.c.l.b16 %v207
    %v303 = vunpack.c.h.b16 %v207
    %v304 = vunpack.c.l.b16 %v208
    %v305 = vunpack.c.h.b16 %v208
    %v306 = vunpack.c.l.b16 %v209
    %v307 = vunpack.c.h.b16 %v209
    %v308 = vunpack.c.l.b16 %v210
    %v309 = vunpack.c.h.b16 %v210
    %v310 = vunpack.c.l.b16 %v211
    %v311 = vunpack.c.h.b16 %v211
    %v312 = vunpack.c.l.b16 %v212
    %v313 = vunpack.c.h.b16 %v212
    %v314 = vunpack.c.l.b16 %v213
    %v315 = vunpack.c.h.b16 %v213
    %v316 = vunpack.c.l.b16 %v214
    %v317 = vunpack.c.h.b16 %v214
    %v318 = vunpack.c.l.b16 %v215
    %v319 = vunpack.c.h.b16 %v215
    %v320 = vpack.c.b16 %v258, %v256
    %v321 = vpack.c.b16 %v259, %v257
    %v322 = vpack.c.b16 %v262, %v260
    %v323 = vpack.c.b16 %v263, %v261
    %v324 = vpack.c.b16 %v266, %v264
    %v325 = vpack.c.b16 %v267, %v265
    %v326 = vpack.c.b16 %v270, %v268
    %v327 = vpack.c.b16 %v271, %v269
    %v328 = vpack.c.b16 %v274, %v272
    %v329 = vpack.c.b16 %v275, %v273
    %v330 = vpack.c.b16 %v278, %v276
    %v331 = vpack.c.b16 %v279, %v277
    %v332 = vpack.c.b16 %v282, %v280
    %v333 = vpack.c.b16 %v283, %v281
    %v334 = vpack.c.b16 %v286, %v284
    %v335 = vpack.c.b16 %v287, %v285
    %v336 = vpack.c.b16 %v290, %v288
    %v337 = vpack.c.b16 %v291, %v289
    %v338 = vpack.c.b16 %v294, %v292
    %v339 = vpack.c.b16 %v295, %v293
    %v340 = vpack.c.b16 %v298, %v296
    %v341 = vpack.c.b16 %v299, %v297
    %v342 = vpack.c.b16 %v302, %v300
    %v343 = vpack.c.b16 %v303, %v301
    %v344 = vpack.c.b16 %v306, %v304
    %v345 = vpack.c.b16 %v307, %v305
    %v346 = vpack.c.b16 %v310, %v308
    %v347 = vpack.c.b16 %v311, %v309
    %v348 = vpack.c.b16 %v314, %v312
    %v349 = vpack.c.b16 %v315, %v313
    %v350 = vpack.c.b16 %v318, %v316
    %v351 = vpack.c.b16 %v319, %v317
    %384 = vmatprep.subr.bf16.mxu0 %v335
    %385 = vmatpush1.bf16.msra.mxu0 %v334
    %386 = vmatprep.subr.bf16.mxu0 %v333
    %387 = vmatpush1.bf16.msra.mxu0 %v332
    %388 = vmatprep.subr.bf16.mxu0 %v331
    %389 = vmatpush1.bf16.msra.mxu0 %v330
    %390 = vmatprep.subr.bf16.mxu0 %v329
    %391 = vmatpush1.bf16.msra.mxu0 %v328
    %392 = vmatprep.subr.bf16.mxu0 %v327
    %393 = vmatpush1.bf16.msra.mxu0 %v326
    %394 = vmatprep.subr.bf16.mxu0 %v325
    %395 = vmatpush1.bf16.msra.mxu0 %v324
    %396 = vmatprep.subr.bf16.mxu0 %v323
    %397 = vmatpush1.bf16.msra.mxu0 %v322
    %398 = vmatprep.subr.bf16.mxu0 %v321
    %399 = vmatpush1.bf16.msra.mxu0 %v320
    %400 = vmatprep.subr.bf16.mxu0 %v351
    %401 = vmatpush2.bf16.msra.mxu0 %v350
    %402 = vmatprep.subr.bf16.mxu0 %v349
    %403 = vmatpush2.bf16.msra.mxu0 %v348
    %404 = vmatprep.subr.bf16.mxu0 %v347
    %405 = vmatpush2.bf16.msra.mxu0 %v346
    %406 = vmatprep.subr.bf16.mxu0 %v345
    %407 = vmatpush2.bf16.msra.mxu0 %v344
    %408 = vmatprep.subr.bf16.mxu0 %v343
    %409 = vmatpush2.bf16.msra.mxu0 %v342
    %410 = vmatprep.subr.bf16.mxu0 %v341
    %411 = vmatpush2.bf16.msra.mxu0 %v340
    %412 = vmatprep.subr.bf16.mxu0 %v339
    %413 = vmatpush2.bf16.msra.mxu0 %v338
    %414 = vmatprep.subr.bf16.mxu0 %v337
    %415 = vmatpush2.bf16.msra.mxu0 %v336
    %416 = vmatprep.mubr.bf16.mxu0 %v183
    %417 = vmatmul.mubr.bf16.gmra.mxu0 %v182
    %v418 = vpop.f32.mrf.mxu0
    %v419 = vadd.f32 %v219, %v418
    %v420 = vpop.f32.mrf.mxu0
    %v421 = vadd.f32 %v223, %v420
    %v422 = vpop.f32.mrf.mxu0
    %v423 = vpop.f32.mrf.mxu0
    %424 = vdwg.mxu0
    %v425 = vadd.f32 %v419, %v421
    %426 = vadd.xlane.f32.xlu0 %v425
    %v427 = vpop.xlane.xlu0 %426
    %v428 = vmul.f32 %v427, 0.00390625
    %v429 = vmul.f32 %v419, %v419
    %v430 = vmul.f32 %v421, %v421
    %v431 = vadd.f32 %v429, %v430
    %432 = vadd.xlane.f32.xlu0 %v431
    %v433 = vpop.xlane.xlu0 %432
    %v434 = vmul.f32 %v433, 0.00390625
    %v435 = vmul.f32 %v428, %v428
    %v436 = vsub.f32 %v434, %v435
    %v437 = vsub.f32 %v419, %v428
    %v438 = vsub.f32 %v421, %v428
    %v439 = vadd.f32 %v436, 1e-05
    %v440 = vrsqrt.pop %v439
    %v441 = vmul.f32 %v437, %v440
    %v442 = vmul.f32 %v438, %v440
    %v443 = vlaneseq
    %v444 = vshrl.u32 %v443, 7
    %v445 = vsub.s32 4, %v444
    %v446 = vrot.slane %v62, %v445
    %v447 = vlaneseq
    %v448 = vshrl.u32 %v447, 7
    %v449 = vsub.s32 4, %v448
    %v450 = vrot.slane %v63, %v449
    %v451 = vmul.f32 %v441, %v446
    %v452 = vmul.f32 %v442, %v450
    %v453 = vlaneseq
    %v454 = vshrl.u32 %v453, 7
    %v455 = vsub.s32 5, %v454
    %v456 = vrot.slane %v62, %v455
    %v457 = vlaneseq
    %v458 = vshrl.u32 %v457, 7
    %v459 = vsub.s32 5, %v458
    %v460 = vrot.slane %v63, %v459
    %v461 = vadd.f32 %v451, %v456
    %v462 = vadd.f32 %v452, %v460
    %v463 = vmax.f32 %v461, 0.0
    %v464 = vmax.f32 %v462, 0.0
    %v465 = vpack.c.bf16 %v463, %v463
    %v466 = vpack.c.bf16 %v464, %v464
    %v467 = vld [vmem:[#allocation6] sm:$0xf]
    %v468 = vld [vmem:[#allocation6 + $0x4] sm:$0xf]
    %v469 = vld [vmem:[#allocation6 + $0x8] sm:$0xf]
    %v470 = vld [vmem:[#allocation6 + $0xc] sm:$0xf]
    %v471 = vld [vmem:[#allocation6 + $0x10] sm:$0xf]
    %v472 = vld [vmem:[#allocation6 + $0x14] sm:$0xf]
    %v473 = vld [vmem:[#allocation6 + $0x18] sm:$0xf]
    %v474 = vld [vmem:[#allocation6 + $0x1c] sm:$0xf]
    %v475 = vld [vmem:[#allocation6 + $0x20] sm:$0xf]
    %v476 = vld [vmem:[#allocation6 + $0x24] sm:$0xf]
    %v477 = vld [vmem:[#allocation6 + $0x28] sm:$0xf]
    %v478 = vld [vmem:[#allocation6 + $0x2c] sm:$0xf]
    %v479 = vld [vmem:[#allocation6 + $0x30] sm:$0xf]
    %v480 = vld [vmem:[#allocation6 + $0x34] sm:$0xf]
    %v481 = vld [vmem:[#allocation6 + $0x38] sm:$0xf]
    %v482 = vld [vmem:[#allocation6 + $0x3c] sm:$0xf]
    %v483 = vld [vmem:[#allocation6 + $0x40] sm:$0xf]
    %v484 = vld [vmem:[#allocation6 + $0x44] sm:$0xf]
    %v485 = vld [vmem:[#allocation6 + $0x48] sm:$0xf]
    %v486 = vld [vmem:[#allocation6 + $0x4c] sm:$0xf]
    %v487 = vld [vmem:[#allocation6 + $0x50] sm:$0xf]
    %v488 = vld [vmem:[#allocation6 + $0x54] sm:$0xf]
    %v489 = vld [vmem:[#allocation6 + $0x58] sm:$0xf]
    %v490 = vld [vmem:[#allocation6 + $0x5c] sm:$0xf]
    %v491 = vld [vmem:[#allocation6 + $0x60] sm:$0xf]
    %v492 = vld [vmem:[#allocation6 + $0x64] sm:$0xf]
    %v493 = vld [vmem:[#allocation6 + $0x68] sm:$0xf]
    %v494 = vld [vmem:[#allocation6 + $0x6c] sm:$0xf]
    %v495 = vld [vmem:[#allocation6 + $0x70] sm:$0xf]
    %v496 = vld [vmem:[#allocation6 + $0x74] sm:$0xf]
    %v497 = vld [vmem:[#allocation6 + $0x78] sm:$0xf]
    %v498 = vld [vmem:[#allocation6 + $0x7c] sm:$0xf]
    %v499 = vlaneseq
    %v500 = vshrl.u32 %v499, 7
    %v501 = vsub.s32 6, %v500
    %v502 = vrot.slane %v62, %v501
    %v535 = vunpack.c.l.b16 %v467
    %v536 = vunpack.c.l.b16 %v468
    %v537 = vunpack.c.l.b16 %v469
    %v538 = vunpack.c.l.b16 %v470
    %v539 = vunpack.c.l.b16 %v471
    %v540 = vunpack.c.l.b16 %v472
    %v541 = vunpack.c.l.b16 %v473
    %v542 = vunpack.c.l.b16 %v474
    %v543 = vunpack.c.l.b16 %v475
    %v544 = vunpack.c.l.b16 %v476
    %v545 = vunpack.c.l.b16 %v477
    %v546 = vunpack.c.l.b16 %v478
    %v547 = vunpack.c.l.b16 %v479
    %v548 = vunpack.c.l.b16 %v480
    %v549 = vunpack.c.l.b16 %v481
    %v550 = vunpack.c.l.b16 %v482
    %v551 = vunpack.c.l.b16 %v483
    %v552 = vunpack.c.l.b16 %v484
    %v553 = vunpack.c.l.b16 %v485
    %v554 = vunpack.c.l.b16 %v486
    %v555 = vunpack.c.l.b16 %v487
    %v556 = vunpack.c.l.b16 %v488
    %v557 = vunpack.c.l.b16 %v489
    %v558 = vunpack.c.l.b16 %v490
    %v559 = vunpack.c.l.b16 %v491
    %v560 = vunpack.c.l.b16 %v492
    %v561 = vunpack.c.l.b16 %v493
    %v562 = vunpack.c.l.b16 %v494
    %v563 = vunpack.c.l.b16 %v495
    %v564 = vunpack.c.l.b16 %v496
    %v565 = vunpack.c.l.b16 %v497
    %v566 = vunpack.c.l.b16 %v498
    %v567 = vpack.c.b16 %v536, %v535
    %v568 = vpack.c.b16 %v538, %v537
    %v569 = vpack.c.b16 %v540, %v539
    %v570 = vpack.c.b16 %v542, %v541
    %v571 = vpack.c.b16 %v544, %v543
    %v572 = vpack.c.b16 %v546, %v545
    %v573 = vpack.c.b16 %v548, %v547
    %v574 = vpack.c.b16 %v550, %v549
    %v575 = vpack.c.b16 %v552, %v551
    %v576 = vpack.c.b16 %v554, %v553
    %v577 = vpack.c.b16 %v556, %v555
    %v578 = vpack.c.b16 %v558, %v557
    %v579 = vpack.c.b16 %v560, %v559
    %v580 = vpack.c.b16 %v562, %v561
    %v581 = vpack.c.b16 %v564, %v563
    %v582 = vpack.c.b16 %v566, %v565
    %599 = vmatprep.subr.bf16.mxu0 0
    %600 = vmatpush1.bf16.msra.mxu0 %v574
    %601 = vmatprep.subr.bf16.mxu0 0
    %602 = vmatpush1.bf16.msra.mxu0 %v573
    %603 = vmatprep.subr.bf16.mxu0 0
    %604 = vmatpush1.bf16.msra.mxu0 %v572
    %605 = vmatprep.subr.bf16.mxu0 0
    %606 = vmatpush1.bf16.msra.mxu0 %v571
    %607 = vmatprep.subr.bf16.mxu0 0
    %608 = vmatpush1.bf16.msra.mxu0 %v570
    %609 = vmatprep.subr.bf16.mxu0 0
    %610 = vmatpush1.bf16.msra.mxu0 %v569
    %611 = vmatprep.subr.bf16.mxu0 0
    %612 = vmatpush1.bf16.msra.mxu0 %v568
    %613 = vmatprep.subr.bf16.mxu0 0
    %614 = vmatpush1.bf16.msra.mxu0 %v567
    %615 = vmatprep.subr.bf16.mxu0 0
    %616 = vmatpush2.bf16.msra.mxu0 %v582
    %617 = vmatprep.subr.bf16.mxu0 0
    %618 = vmatpush2.bf16.msra.mxu0 %v581
    %619 = vmatprep.subr.bf16.mxu0 0
    %620 = vmatpush2.bf16.msra.mxu0 %v580
    %621 = vmatprep.subr.bf16.mxu0 0
    %622 = vmatpush2.bf16.msra.mxu0 %v579
    %623 = vmatprep.subr.bf16.mxu0 0
    %624 = vmatpush2.bf16.msra.mxu0 %v578
    %625 = vmatprep.subr.bf16.mxu0 0
    %626 = vmatpush2.bf16.msra.mxu0 %v577
    %627 = vmatprep.subr.bf16.mxu0 0
    %628 = vmatpush2.bf16.msra.mxu0 %v576
    %629 = vmatprep.subr.bf16.mxu0 0
    %630 = vmatpush2.bf16.msra.mxu0 %v575
    %631 = vmatprep.mubr.bf16.mxu0 %v466
    %632 = vmatmul.mubr.bf16.gmra.mxu0 %v465
    %v633 = vpop.f32.mrf.mxu0
    %v634 = vadd.f32 %v502, %v633
    %v635 = vpop.f32.mrf.mxu0
    %v636 = vpop.f32.mrf.mxu0
    %v637 = vpop.f32.mrf.mxu0
    %638 = vdwg.mxu0
    %v639 = vmax.f32 %v634, 0.0
    %v640 = vadd.f32 %v639, 1e-06
    %642 = vrot.lane.b32.xlu0 %v634, 120
    %v643 = vpop.permute.xlu0 %642
    %v645 = vmax.f32 %v634, %v643
    %646 = vrot.lane.b32.xlu0 %v634, 112
    %v647 = vpop.permute.xlu0 %646
    %v649 = vmax.f32 %v645, %v647
    %650 = vrot.lane.b32.xlu0 %v634, 104
    %v651 = vpop.permute.xlu0 %650
    %v653 = vmax.f32 %v649, %v651
    %655 = vrot.lane.b32.xlu0 %v653, 8
    %v656 = vpop.permute.xlu0 %655
    %658 = vrot.lane.b32.xlu0 %v653, 16
    %v659 = vpop.permute.xlu0 %658
    %661 = vrot.lane.b32.xlu0 %v653, 24
    %v662 = vpop.permute.xlu0 %661
    %vm664 = vcmask 64512
    %v665 = vsel %vm664, %v653, %v656
    %vm666 = vcmask 130048
    %v667 = vsel %vm666, %v665, %v659
    %vm668 = vcmask 195584
    %v669 = vsel %vm668, %v667, %v662
    %v670 = vsub.f32 %v634, %v669
    %v671 = vmul.f32 %v670, 1.442695
    %v672 = vpow.pop %v671
    %674 = vrot.lane.b32.xlu0 %v672, 120
    %v675 = vpop.permute.xlu0 %674
    %v677 = vadd.f32 %v672, %v675
    %678 = vrot.lane.b32.xlu0 %v672, 112
    %v679 = vpop.permute.xlu0 %678
    %v681 = vadd.f32 %v677, %v679
    %682 = vrot.lane.b32.xlu0 %v672, 104
    %v683 = vpop.permute.xlu0 %682
    %v685 = vadd.f32 %v681, %v683
    %v686 = vrcp.pop %v685
    %688 = vrot.lane.b32.xlu0 %v686, 8
    %v689 = vpop.permute.xlu0 %688
    %691 = vrot.lane.b32.xlu0 %v686, 16
    %v692 = vpop.permute.xlu0 %691
    %694 = vrot.lane.b32.xlu0 %v686, 24
    %v695 = vpop.permute.xlu0 %694
    %v697 = vsel %vm664, %v686, %v689
    %v698 = vsel %vm666, %v697, %v692
    %v699 = vsel %vm668, %v698, %v695
    %v700 = vmul.f32 %v672, %v699
    %v701 = vsel %vm97, %v700, %v640
    %vm702 = vcmask 326656
    %v703 = vsel %vm702, %v701, 0.0
    %704 = vst [vmem:[%s5] sm:$0xff] %v703
    // Predicated region
    $region34: #{actor_forward.1} parent=1 // pred_check
      _
    $region35: #{actor_forward.1} parent=1 // pred_check_branch
      %706 = sbr.rel (0) target = $region37
    $region36: #{actor_forward.1} parent=1 // pred_region
      _
    $region37: #{actor_forward.1} parent=1 // pred_fallthru
      _
    // Predicated region
    $region38: #{actor_forward.1} parent=1 // pred_check
      _
    $region39: #{actor_forward.1} parent=1 // pred_check_branch
      %708 = sbr.rel (0) target = $region41
    $region40: #{actor_forward.1} parent=1 // pred_region
      _
    $region41: #{actor_forward.1} parent=1 // pred_fallthru
      _
    %709 = vsyncpa [#allocation3], 1
    %710 = vsyncpa [#allocation5], 1

</llo_original>
